<compile_context>
chip_gen: v7x
topology: tpu7x:2x2x1
jax: 0.10.0
libtpu: 0.0.40
codegen_flags: <defaults>
</compile_context>

<pallas_src>
import functools
import math

import jax
import jax.numpy as jnp
from jax import lax
from jax.experimental import pallas as pl
from jax.experimental.pallas import tpu as pltpu

_EPS = 1e-9

# sum/mean path: lane-dense flattened slab (rows, 128)
_SUM_BLOCK_ROWS = 4096            # 4096 x 128 f32 = 2 MiB / block (x2 double-buffered)
_NUM_SHARDS = 2                   # leading 'parallel' axis -> both TCs on v7x

# 'none' path: target ~2 MiB (row_tile, N) input blocks
_NONE_BLOCK_BYTES = 2 * 1024 * 1024

_VMEM_LIMIT = 32 * 1024 * 1024    # raise v5e's 16 MiB scoped default


def _round_up(x, m):
    return (x + m - 1) // m * m


# ---------------------------------------------------------------------------
# reduction = 'sum' / 'mean'
# ---------------------------------------------------------------------------
def _entropy_sum_kernel(valid_rows, block_rows, need_mask,
                        x_ref, out_ref, acc_ref):
    s = pl.program_id(0)          # shard (parallel)
    i = pl.program_id(1)          # block within shard (arbitrary / reduction)

    @pl.when(i == 0)
    def _init():
        acc_ref[...] = jnp.zeros_like(acc_ref)

    p = x_ref[...].astype(jnp.float32)                       # (block_rows, 128)
    if need_mask:
        # Mask rows belonging to the ragged last block and to clamped overhang
        # blocks of the shard partition (their data is garbage / duplicated).
        steps = pl.num_programs(1)
        blk = s * steps + i
        row = blk * block_rows + lax.broadcasted_iota(jnp.int32, p.shape, 0)
        p = jnp.where(row < valid_rows, p, 0.0)

    # Accumulate raw sum of p*log(p+eps); coef / scale applied in the wrapper.
    acc_ref[...] += jnp.sum(p * jnp.log(p + _EPS), axis=0, keepdims=True)

    @pl.when(i == pl.num_programs(1) - 1)
    def _flush():
        out_ref[...] = acc_ref[...]


def _entropy_loss_reduced(probs, coef, scale):
    x = probs.reshape(-1)                                    # free reshape, native dtype
    total = x.shape[0]

    # Reshape to a lane-dense (rows, 128) slab. Pad only if numel is not already
    # a multiple of 8*128 (zero elements contribute 0*log(eps) == 0).
    chunk = 8 * 128
    if total % chunk:
        x = jnp.pad(x, (0, chunk - total % chunk))
    rows = x.shape[0] // 128
    x = x.reshape(rows, 128)

    block_rows = min(_SUM_BLOCK_ROWS, rows)
    nblocks = pl.cdiv(rows, block_rows)
    steps = pl.cdiv(nblocks, _NUM_SHARDS)
    need_mask = (rows % block_rows != 0) or (steps * _NUM_SHARDS != nblocks)

    def x_map(s, i):
        blk = s * steps + i
        # Clamp so no DMA ever goes past the array; duplicates are masked to 0
        # inside the kernel.
        return (jnp.minimum(blk, nblocks - 1), 0)

    partials = pl.pallas_call(
        functools.partial(_entropy_sum_kernel, rows, block_rows, need_mask),
        out_shape=jax.ShapeDtypeStruct((_NUM_SHARDS, 1, 128), jnp.float32),
        grid=(_NUM_SHARDS, steps),
        in_specs=[pl.BlockSpec((block_rows, 128), x_map)],
        out_specs=pl.BlockSpec((None, 1, 128), lambda s, i: (s, 0, 0)),
        scratch_shapes=[pltpu.VMEM((1, 128), jnp.float32)],
        compiler_params=pltpu.CompilerParams(
            dimension_semantics=("parallel", "arbitrary"),
            vmem_limit_bytes=_VMEM_LIMIT),
    )(x)

    # loss = -coef * entropy  =>  sum(loss) = coef * sum(p*log(p+eps))
    return jnp.float32(coef * scale) * jnp.sum(partials)


# ---------------------------------------------------------------------------
# reduction = 'none'
# ---------------------------------------------------------------------------
def _entropy_none_kernel(coef, x_ref, out_ref):
    p = x_ref[...].astype(jnp.float32)                                   # (rt, N)
    # loss_row = -coef * entropy_row = coef * sum_j p*log(p+eps)
    loss = jnp.float32(coef) * jnp.sum(p * jnp.log(p + _EPS),
                                       axis=-1, keepdims=True)           # (rt, 1)
    out_ref[...] = loss.astype(out_ref.dtype)


def _entropy_loss_none(probs, coef):
    orig_shape = probs.shape
    n = orig_shape[-1]
    r = math.prod(orig_shape[:-1])
    x = probs.reshape(r, n)                                  # free reshape, native dtype

    itemsize = jnp.dtype(x.dtype).itemsize
    rt = max(8, (_NONE_BLOCK_BYTES // max(1, n * itemsize)) // 8 * 8)
    rt = min(rt, _round_up(r, 8))
    nblocks = pl.cdiv(r, rt)

    out = pl.pallas_call(
        functools.partial(_entropy_none_kernel, coef),
        out_shape=jax.ShapeDtypeStruct((nblocks * rt, 1), jnp.float32),
        grid=(nblocks,),
        in_specs=[pl.BlockSpec((rt, n), lambda i: (i, 0))],
        out_specs=pl.BlockSpec((rt, 1), lambda i: (i, 0)),
        compiler_params=pltpu.CompilerParams(
            dimension_semantics=("parallel",),
            vmem_limit_bytes=_VMEM_LIMIT),
    )(x)
    # Rows >= r hold garbage from the ragged last input block; slice them off.
    return out[:r, 0].reshape(orig_shape[:-1])


# ---------------------------------------------------------------------------
# public entry point
# ---------------------------------------------------------------------------
def entropy_loss(probs, coef=0.01, reduction="sum"):
    """Pallas implementation of EntropyLoss.forward."""
    if reduction == "sum":
        return _entropy_loss_reduced(probs, coef, 1.0)
    if reduction == "mean":
        r = math.prod(probs.shape[:-1])
        return _entropy_loss_reduced(probs, coef, 1.0 / r)
    if reduction == "none":
        return _entropy_loss_none(probs, coef)
    raise ValueError(f"unsupported reduction: {reduction}")


def _reference(probs, coef=0.01, reduction="sum"):
    p = probs.astype(jnp.float32)
    entropy = -jnp.sum(p * jnp.log(p + _EPS), axis=-1)
    loss = -coef * entropy
    if reduction == "sum":
        return jnp.sum(loss)
    if reduction == "mean":
        return jnp.mean(loss)
    return loss


if __name__ == "__main__":
    key = jax.random.PRNGKey(0)
    # batch=2, seq=8, classes=32 — distribution over the last axis.
    logits = jax.random.normal(key, (2, 8, 32), dtype=jnp.float32)
    probs = jax.nn.softmax(logits, axis=-1)

    coef = 0.01

    # Default reduction='sum' (module default).
    out_sum = jax.block_until_ready(entropy_loss(probs, coef=coef, reduction="sum"))
    ref_sum = _reference(probs, coef=coef, reduction="sum")
    assert jnp.allclose(out_sum, ref_sum, rtol=1e-5, atol=1e-6), (out_sum, ref_sum)

    # Also exercise 'mean' and 'none' paths of _maybe_reduction.
    out_mean = jax.block_until_ready(entropy_loss(probs, coef=coef, reduction="mean"))
    ref_mean = _reference(probs, coef=coef, reduction="mean")
    assert jnp.allclose(out_mean, ref_mean, rtol=1e-5, atol=1e-6), (out_mean, ref_mean)

    out_none = jax.block_until_ready(entropy_loss(probs, coef=coef, reduction="none"))
    ref_none = _reference(probs, coef=coef, reduction="none")
    assert out_none.shape == ref_none.shape
    assert jnp.allclose(out_none, ref_none, rtol=1e-5, atol=1e-6)

    print("KERNEL_OK")
</pallas_src>

<mosaic_0001>
module attributes {stable_mosaic.version = 11 : i64} {
  func.func @_entropy_sum_kernel(%arg0: i32, %arg1: i32, %arg2: memref<8x128xf32, #tpu.memory_space<vmem>>, %arg3: memref<1x1x128xf32, #tpu.memory_space<vmem>>, %arg4: memref<1x128xf32, #tpu.memory_space<vmem>>) attributes {dimension_semantics = [#tpu.dimension_semantics<parallel>, #tpu.dimension_semantics<arbitrary>], iteration_bounds = array<i64: 2, 1>, scalar_prefetch = 0 : i64, scratch_operands = 1 : i64, tpu.core_type = #tpu.core_type<tc>, window_params = [{transform_indices = @transform_0, window_bounds = array<i64: 8, 128>}, {transform_indices = @transform_1, window_bounds = array<i64: 1, 1, 128>}]} {
    %c0_i32 = arith.constant 0 : i32
    %0 = arith.cmpi eq, %arg1, %c0_i32 : i32
    %1 = arith.extui %0 : i1 to i32
    %c0_i32_0 = arith.constant 0 : i32
    %2 = arith.cmpi ne, %1, %c0_i32_0 : i32
    scf.if %2 {
      %cst_11 = arith.constant 0.000000e+00 : f32
      %26 = vector.broadcast %cst_11 : f32 to vector<1x128xf32>
      %c0_12 = arith.constant 0 : index
      %c0_13 = arith.constant 0 : index
      %27 = vector.load %arg4[%c0_12, %c0_13] : memref<1x128xf32, #tpu.memory_space<vmem>>, vector<1x128xf32>
      tpu.vector_store %arg4[%c0_12, %c0_13], %26 {strides = array<i32>} : memref<1x128xf32, #tpu.memory_space<vmem>>, vector<1x128xf32>,
    } else {
    }
    %c0 = arith.constant 0 : index
    %c0_1 = arith.constant 0 : index
    %3 = vector.load %arg2[%c0, %c0_1] : memref<8x128xf32, #tpu.memory_space<vmem>>, vector<8x128xf32>
    %c1_i32 = arith.constant 1 : i32
    %4 = arith.muli %arg0, %c1_i32 : i32
    %5 = arith.addi %4, %arg1 : i32
    %c8_i32 = arith.constant 8 : i32
    %6 = arith.muli %5, %c8_i32 : i32
    %7 = tpu.iota {dimensions = array<i32: 0>} : vector<8x128xi32>
    %8 = vector.broadcast %6 : i32 to vector<8x128xi32>
    %9 = arith.addi %8, %7 : vector<8x128xi32>
    %c8_i32_2 = arith.constant 8 : i32
    %10 = vector.broadcast %c8_i32_2 : i32 to vector<8x128xi32>
    %11 = arith.cmpi slt, %9, %10 : vector<8x128xi32>
    %cst = arith.constant 0.000000e+00 : f32
    %12 = vector.broadcast %cst : f32 to vector<8x128xf32>
    %13 = arith.select %11, %3, %12 : vector<8x128xi1>, vector<8x128xf32>
    %c0_3 = arith.constant 0 : index
    %c0_4 = arith.constant 0 : index
    %14 = vector.load %arg4[%c0_3, %c0_4] : memref<1x128xf32, #tpu.memory_space<vmem>>, vector<1x128xf32>
    %cst_5 = arith.constant 9.99999971E-10 : f32
    %15 = vector.broadcast %cst_5 : f32 to vector<8x128xf32>
    %16 = arith.addf %13, %15 : vector<8x128xf32>
    %17 = math.log %16 : vector<8x128xf32>
    %18 = arith.mulf %13, %17 : vector<8x128xf32>
    %cst_6 = arith.constant dense<0.000000e+00> : vector<128xf32>
    %19 = vector.multi_reduction <add>, %18, %cst_6 [0] : vector<8x128xf32> to vector<128xf32>
    %20 = vector.shape_cast %19 : vector<128xf32> to vector<1x128xf32>
    %21 = arith.addf %14, %20 : vector<1x128xf32>
    %c0_7 = arith.constant 0 : index
    %c0_8 = arith.constant 0 : index
    %22 = vector.load %arg4[%c0_7, %c0_8] : memref<1x128xf32, #tpu.memory_space<vmem>>, vector<1x128xf32>
    tpu.vector_store %arg4[%c0_7, %c0_8], %21 {strides = array<i32>} : memref<1x128xf32, #tpu.memory_space<vmem>>, vector<1x128xf32>,
    %c0_i32_9 = arith.constant 0 : i32
    %23 = arith.cmpi eq, %arg1, %c0_i32_9 : i32
    %24 = arith.extui %23 : i1 to i32
    %c0_i32_10 = arith.constant 0 : i32
    %25 = arith.cmpi ne, %24, %c0_i32_10 : i32
    scf.if %25 {
      %c0_11 = arith.constant 0 : index
      %c0_12 = arith.constant 0 : index
      %26 = vector.load %arg4[%c0_11, %c0_12] : memref<1x128xf32, #tpu.memory_space<vmem>>, vector<1x128xf32>
      %c0_13 = arith.constant 0 : index
      %c0_14 = arith.constant 0 : index
      %c0_15 = arith.constant 0 : index
      %27 = vector.load %arg3[%c0_13, %c0_14, %c0_15] : memref<1x1x128xf32, #tpu.memory_space<vmem>>, vector<1x1x128xf32>
      %28 = vector.shape_cast %27 : vector<1x1x128xf32> to vector<1x128xf32>
      %29 = vector.shape_cast %26 : vector<1x128xf32> to vector<1x1x128xf32>
      tpu.vector_store %arg3[%c0_13, %c0_14, %c0_15], %29 {strides = array<i32>} : memref<1x1x128xf32, #tpu.memory_space<vmem>>, vector<1x1x128xf32>,
    } else {
    }
    return
  }
  func.func @transform_0(%arg0: i32, %arg1: i32) -> (i32, i32) {
    %c1_i32 = arith.constant 1 : i32
    %0 = arith.muli %arg0, %c1_i32 : i32
    %1 = arith.addi %0, %arg1 : i32
    %c0_i32 = arith.constant 0 : i32
    %2 = arith.minsi %1, %c0_i32 : i32
    %c0_i32_0 = arith.constant 0 : i32
    %c0_i32_1 = arith.constant 0 : i32
    return %2, %c0_i32_0 : i32, i32
  }
  func.func @transform_1(%arg0: i32, %arg1: i32) -> (i32, i32, i32) {
    %c0_i32 = arith.constant 0 : i32
    %c0_i32_0 = arith.constant 0 : i32
    %c0_i32_1 = arith.constant 0 : i32
    return %arg0, %c0_i32, %c0_i32_0 : i32, i32, i32
  }
}

</mosaic_0001>

<llo_original>
// kernel: tpu_custom_call.1
$region0: #{tpu_custom_call.1}
  #allocation0 [shape = 'u32[]', space=smem, size = 0x4, offset = 0x4, fixed_abs, tag = 'smem constant byte address 0x4 - core index']
  #allocation1 [shape = 'u32[144,128]{1,0:T(1,128)}', space=vmem, size = 0x12000, scoped, tag = 'internal scratch']
  #allocation2 [shape = 'f32[1,128]{1,0:T(1,128)}', space=vmem, size = 0x200, scoped, tag = 'scratch operand']
  %s0 = inlined_call_operand.hbm [shape: f32[8,128], index: 0, kind: input, shape index: {}]
  %s1 = inlined_call_operand.hbm [shape: f32[2,1,128], index: 1, kind: output, shape index: {}]
  %s2 = sld [smem:[#allocation0]]
  $region49: #{tpu_custom_call.1} parent=0
    _
  %s4 = ssub.s32 1, %s2
  %s5 = scalar_select 0, %s4, %s2
  $region1: #{tpu_custom_call.1} parent=0
    #allocation3 [shape = 'u8[8192]{0}', space=vmem, size = 0x2000, scoped, tag = 'input window, operand 0']
    #allocation4 [shape = 's32[2]{0}', space=sflag, size = 0x8, scoped, tag = 'scoped memory for tpu_custom_call.1']
    #allocation5 [shape = 's32[2]{0}', space=sflag, size = 0x8, scoped, tag = 'scoped memory for tpu_custom_call.1']
    #allocation6 [shape = 'u8[1024]{0}', space=vmem, size = 0x400, scoped, tag = 'output window, operand 0']
    %6 = vsyncpa [#allocation4], 0
    %s7 = scalar_lea.sflag [#allocation4], 1
    %8 = vsyncpa %s7, 0
    %9 = vsyncpa [#allocation5], 0
    %s10 = scalar_lea.sflag [#allocation5], 1
    %11 = vsyncpa %s10, 0
    loop: start=0, step=1, limit=4
    $region2: #{tpu_custom_call.1} parent=1 // loop_pre_header
      _
    $region3: #{tpu_custom_call.1} parent=1 // loop_header
      %s13 = sphi 0, %s17
      %p14 = scmp.ge.s32.totalorder %s13, 4
      %s20 = sphi 0, %s32
      %s21 = sphi 0, %s28
      %s22 = sphi 0, %s20
      %s23 = sphi 0, %s21
      %s24 = sphi 0, %s22
      %s25 = sphi 0, %s23
      %s41 = sphi 0, %s43
      %s44 = sphi 0, %s41
      %s45 = sphi 0, %s44
      %s61 = sphi 0, %s45
      %s67 = sphi 0, %s69
      %s70 = sphi 0, %s67
      %s71 = sphi 0, %s70
      %s87 = sphi 0, %s71
    $region4: #{tpu_custom_call.1} parent=1 // loop_header_branch
      %16 = sbr.rel (%p14) target = $region8
    $region5: #{tpu_custom_call.1} parent=1 // loop_body
      %s18 = ssub.s32 %s13, 1
      %s19 = ssub.s32 %s13, 2
      %s26 = sadd.s32 1, %s21
      %p27 = scmp.ge.s32.totalorder %s26, 1
      %s28 = scalar_select %p27, 0, %s26
      %s29 = sadd.s32 1, %s20
      %s30 = scalar_select %p27, %s29, %s20
      %p31 = scmp.ge.s32.totalorder %s30, 2
      %s32 = scalar_select %p31, 0, %s30
      %s33 = sadd.s32 %s20, %s21
      %p34 = scmp.lt.s32.totalorder %s33, 0
      %s35 = scalar_select %p34, %s33, 0
      %s36 = sadd.s32 %s32, %s28
      %p37 = scmp.lt.s32.totalorder %s36, 0
      %s38 = scalar_select %p37, %s36, 0
      %s39 = ssub.s32 %s35, %s38
      %p40 = scmp.eq.s32.totalorder %s39, 0
      %s42 = sadd.s32 %s41, 1
      %s43 = scalar_select %p40, %s41, %s42
      %p46 = pneg %p40
      %p47 = scmp.eq.s32.totalorder %s13, 1
      %p48 = por %p46, %p47
      %p49 = scmp.ne.s32.totalorder %s41, %s44
      %p50 = scmp.eq.s32.totalorder %s13, 0
      %p51 = por %p49, %p50
      %p52 = scmp.ne.s32.totalorder %s41, %s44
      %p53 = scmp.eq.s32.totalorder %s18, 1
      %p54 = por %p52, %p53
      %p55 = scmp.ne.s32.totalorder %s44, %s45
      %p56 = scmp.eq.s32.totalorder %s18, 0
      %p57 = por %p55, %p56
      %p58 = scmp.ne.s32.totalorder %s44, %s45
      %p59 = scmp.eq.s32.totalorder %s19, 1
      %p60 = por %p58, %p59
      %p62 = scmp.ne.s32.totalorder %s45, %s61
      %p63 = scmp.eq.s32.totalorder %s19, 0
      %p64 = por %p62, %p63
      %s65 = ssub.s32 %s20, %s32
      %p66 = scmp.eq.s32.totalorder %s65, 0
      %s68 = sadd.s32 %s67, 1
      %s69 = scalar_select %p66, %s67, %s68
      %p72 = pneg %p66
      %p73 = scmp.eq.s32.totalorder %s13, 1
      %p74 = por %p72, %p73
      %p75 = scmp.ne.s32.totalorder %s67, %s70
      %p76 = scmp.eq.s32.totalorder %s13, 0
      %p77 = por %p75, %p76
      %p78 = scmp.ne.s32.totalorder %s67, %s70
      %p79 = scmp.eq.s32.totalorder %s18, 1
      %p80 = por %p78, %p79
      %p81 = scmp.ne.s32.totalorder %s70, %s71
      %p82 = scmp.eq.s32.totalorder %s18, 0
      %p83 = por %p81, %p82
      %p84 = scmp.ne.s32.totalorder %s70, %s71
      %p85 = scmp.eq.s32.totalorder %s19, 1
      %p86 = por %p84, %p85
      %p88 = scmp.ne.s32.totalorder %s71, %s87
      %p89 = scmp.eq.s32.totalorder %s19, 0
      %p90 = por %p88, %p89
      %p91 = scmp.le.s32.totalorder 1, %s13
      %p92 = scmp.lt.s32.totalorder %s13, 3
      %p93 = pnand %p91, %p92
      %p94 = pneg %p93
      // Predicated region
      $region9: #{tpu_custom_call.1} parent=5 // pred_check
        _
      $region10: #{tpu_custom_call.1} parent=5 // pred_check_branch
        %96 = sbr.rel (%p93) target = $region12
      $region11: #{tpu_custom_call.1} parent=5 // pred_region
        %s97 = ssub.s32 %s13, 1
      $region12: #{tpu_custom_call.1} parent=5 // pred_fallthru
        _
      %p98 = scmp.lt.s32.totalorder %s13, 2
      // Predicated region
      $region13: #{tpu_custom_call.1} parent=5 // pred_check
        %p99 = pneg %p98
      $region14: #{tpu_custom_call.1} parent=5 // pred_check_branch
        %101 = sbr.rel (%p99) target = $region16
      $region15: #{tpu_custom_call.1} parent=5 // pred_region
        // Predicated region
        $region17: #{tpu_custom_call.1} parent=15 // pred_check
          %p102 = pneg %p51
        $region18: #{tpu_custom_call.1} parent=15 // pred_check_branch
          %104 = sbr.rel (%p102) target = $region20
        $region19: #{tpu_custom_call.1} parent=15 // pred_region
          %s105 = sand.u32 %s41, 1
          %s106 = scalar_lea.sflag [#allocation4], %s105
          %s107 = sand.u32 %s41, 1
          %s108 = smul.addr %s107, 8
          %s109 = scalar_lea.vmem [#allocation3], %s108
          %s110 = sadd.s32 %s20, %s21
          %p111 = scmp.lt.s32.totalorder %s110, 0
          %s112 = scalar_select %p111, %s110, 0
          %s114 = ssub.s32 128, 128
          %115 = vsyncadd %s106, %s114
          %s116 = smul.addr %s112, 128
          %s117 = scalar_lea.hbm %s0, %s116
          %s119 = sshll.u32 %s109, 4
          %s120 = int_to_ptr.vmem [resolvable:$true] %s119
          %122 = dma.hbm_to_vmem [thread:$0]  %s117, 128, %s120, %s106
        $region20: #{tpu_custom_call.1} parent=15 // pred_fallthru
          _
      $region16: #{tpu_custom_call.1} parent=5 // pred_fallthru
        _
      %p123 = scmp.le.s32.totalorder 1, %s13
      %p124 = scmp.lt.s32.totalorder %s13, 3
      %p125 = pnand %p123, %p124
      %p126 = pneg %p125
      // Predicated region
      $region21: #{tpu_custom_call.1} parent=5 // pred_check
        _
      $region22: #{tpu_custom_call.1} parent=5 // pred_check_branch
        %128 = sbr.rel (%p125) target = $region24
      $region23: #{tpu_custom_call.1} parent=5 // pred_region
        %s129 = ssub.s32 %s13, 1
        %s130 = sand.u32 %s44, 1
        %s131 = scalar_lea.sflag [#allocation4], %s130
        %s132 = sand.u32 %s44, 1
        %s133 = smul.addr %s132, 8
        %s134 = scalar_lea.vmem [#allocation3], %s133
        // Predicated region
        $region25: #{tpu_custom_call.1} parent=23 // pred_check
          %p135 = pneg %p57
        $region26: #{tpu_custom_call.1} parent=23 // pred_check_branch
          %137 = sbr.rel (%p135) target = $region28
        $region27: #{tpu_custom_call.1} parent=23 // pred_region
          %138 = dma.done %s131, 128
        $region28: #{tpu_custom_call.1} parent=23 // pred_fallthru
          _
        %s139 = sand.u32 %s44, 1
        %s140 = scalar_lea.sflag [#allocation4], %s139
        %s141 = sand.u32 %s44, 1
        %s142 = smul.addr %s141, 8
        %s143 = scalar_lea.vmem [#allocation3], %s142
        %p144 = pneg %p57
        %p145 = pneg %p54
        %p146 = pneg %p83
        %p147 = pneg %p80
        %s148 = sand.u32 %s70, 1
        %s149 = scalar_lea.sflag [#allocation5], %s148
        %s150 = sand.u32 %s70, 1
        %s151 = scalar_lea.vmem [#allocation6], %s150
        %s152 = sadd.s32 %s22, %s23
        %p153 = scmp.lt.s32.totalorder %s152, 0
        %s154 = scalar_select %p153, %s152, 0
        %p155 = scmp.eq.s32.totalorder %s23, 0
        // Predicated region
        $region29: #{tpu_custom_call.1} parent=23 // pred_check
          %p156 = pneg %p155
        $region30: #{tpu_custom_call.1} parent=23 // pred_check_branch
          %158 = sbr.rel (%p156) target = $region32
        $region31: #{tpu_custom_call.1} parent=23 // pred_region
          %159 = vst [vmem:[#allocation2] sm:$0x1] 0.0
        $region32: #{tpu_custom_call.1} parent=23 // pred_fallthru
          _
        %v160 = vld [vmem:[%s134] sm:$0xff]
        %s161 = sadd.s32 %s22, %s23
        %s162 = smul.u32 %s161, 8
        %v163 = vlaneseq
        %v164 = vshrl.u32 %v163, 7
        %v165 = vstv %s162
        %v166 = vadd.s32 %v165, %v164
        %vm167 = vcmp.lt.s32.totalorder %v166, 8
        %v168 = vsel %vm167, %v160, 0.0
        %v169 = vld [vmem:[#allocation2] sm:$0x1]
        %v170 = vadd.f32 %v168, 1e-09
        %v171 = vlog2.pop %v170
        %v172 = vmul.f32 %v171, 0.6931472
        %v173 = vmul.f32 %v168, %v172
        %v174 = vrot.slane %v173, 4
        %v175 = vadd.f32 %v173, %v174
        %v176 = vrot.slane %v175, 2
        %v177 = vadd.f32 %v175, %v176
        %v178 = vrot.slane %v177, 1
        %v179 = vadd.f32 %v177, %v178
        %v180 = vadd.f32 %v169, %v179
        %181 = vst [vmem:[#allocation2] sm:$0x1] %v180
        // Predicated region
        $region33: #{tpu_custom_call.1} parent=23 // pred_check
          %p182 = pneg %p155
        $region34: #{tpu_custom_call.1} parent=23 // pred_check_branch
          %184 = sbr.rel (%p182) target = $region36
        $region35: #{tpu_custom_call.1} parent=23 // pred_region
          %v185 = vld [vmem:[#allocation2] sm:$0x1]
          %186 = vst [vmem:[%s151] sm:$0x1] %v185
        $region36: #{tpu_custom_call.1} parent=23 // pred_fallthru
          _
        %s187 = sand.u32 %s70, 1
        %s188 = scalar_lea.sflag [#allocation5], %s187
        %s189 = sand.u32 %s70, 1
        %s190 = scalar_lea.vmem [#allocation6], %s189
        // Predicated region
        $region37: #{tpu_custom_call.1} parent=23 // pred_check
          %p191 = pneg %p80
        $region38: #{tpu_custom_call.1} parent=23 // pred_check_branch
          %193 = sbr.rel (%p191) target = $region40
        $region39: #{tpu_custom_call.1} parent=23 // pred_region
          %s195 = ssub.s32 16, 16
          %196 = vsyncadd %s188, %s195
          %s197 = smul.addr %s22, 16
          %s198 = scalar_lea.hbm %s1, %s197
          %s200 = sshll.u32 %s190, 4
          %s201 = int_to_ptr.vmem [resolvable:$true] %s200
          %203 = dma.vmem_to_hbm [thread:$0]  %s201, 16, %s198, %s188
        $region40: #{tpu_custom_call.1} parent=23 // pred_fallthru
          _
      $region24: #{tpu_custom_call.1} parent=5 // pred_fallthru
        _
      %p204 = scmp.le.s32.totalorder 2, %s13
      // Predicated region
      $region41: #{tpu_custom_call.1} parent=5 // pred_check
        %p205 = pneg %p204
      $region42: #{tpu_custom_call.1} parent=5 // pred_check_branch
        %207 = sbr.rel (%p205) target = $region44
      $region43: #{tpu_custom_call.1} parent=5 // pred_region
        %s208 = ssub.s32 %s13, 2
        // Predicated region
        $region45: #{tpu_custom_call.1} parent=43 // pred_check
          %p209 = pneg %p86
        $region46: #{tpu_custom_call.1} parent=43 // pred_check_branch
          %211 = sbr.rel (%p209) target = $region48
        $region47: #{tpu_custom_call.1} parent=43 // pred_region
          %s212 = sand.u32 %s71, 1
          %s213 = scalar_lea.sflag [#allocation5], %s212
          %s214 = sand.u32 %s71, 1
          %s215 = scalar_lea.vmem [#allocation6], %s214
          %216 = dma.done %s213, 16
        $region48: #{tpu_custom_call.1} parent=43 // pred_fallthru
          _
      $region44: #{tpu_custom_call.1} parent=5 // pred_fallthru
        _
    $region6: #{tpu_custom_call.1} parent=1 // loop_footer
      %s17 = sadd.s32 1, %s13
    $region7: #{tpu_custom_call.1} parent=1 // loop_footer_branch
      %12 = sbr.rel target = $region3
    $region8: #{tpu_custom_call.1} parent=1 // loop_exit
      _
    %217 = vsyncpa [#allocation4], 1
    %s218 = scalar_lea.sflag [#allocation4], 1
    %219 = vsyncpa %s218, 1
    %220 = vsyncpa [#allocation5], 1
    %s221 = scalar_lea.sflag [#allocation5], 1
    %222 = vsyncpa %s221, 1

</llo_original>
